<compile_context>
chip_gen: v5e
topology: v5e:2x2
jax: 0.10.0
libtpu: 0.0.40
codegen_flags: <defaults>
</compile_context>

<pallas_src>
import jax
import jax.numpy as jnp
from jax.experimental import pallas as pl
from jax.experimental.pallas import tpu as pltpu


def _sggru_kernel(
    x_ref,        # (1, Din)   input vector, f32
    w_mlp_ref,    # (Din, H)   mlp Linear weight (transposed), bf16
    state_ref,    # (1, 2H)    packed [h_syn | hg] state, f32
    w_filt_ref,   # (H, 3H)    fused SGGRUCell weights for filt: [Wxz|Wxr|Wxn]^T
    w_state_ref,  # (2H, 3H)   fused SGGRUCell weights for [h|hg] rows
    w_geo_ref,    # (H, 2H)    fused GRUCell input weights: [Wiz|Win]^T
    out_ref,      # (1, 2H)    packed output [hp | hg_new], f32
):
    f32, bf16 = jnp.float32, jnp.bfloat16
    H = w_mlp_ref.shape[1]
    dot = lambda a, b: jnp.dot(a.astype(bf16), b, preferred_element_type=f32)

    state = state_ref[...]                      # (1, 2H) = [h_syn | hg]
    h = state[:, 0:H]

    # mlp: nn.Linear(input_size, hidden_size, bias=False) + Tanh
    filt = jnp.tanh(dot(x_ref[...], w_mlp_ref[...]))

    # SGGRUCell(filter_, hg): all three gate pre-activations in one fused
    # (1, 3H) value, columns ordered [z | r | n].
    gates = dot(filt, w_filt_ref[...]) + dot(state, w_state_ref[...])
    z = jax.nn.sigmoid(gates[:, 0:H])
    r = jax.nn.sigmoid(gates[:, H:2 * H])
    n = jnp.tanh(gates[:, 2 * H:3 * H] + r * h)
    hp = (1.0 - z) * h + z * n

    # geometric nn.GRUCell(hp, hx=None): hx == 0 zeroes every hidden-path term
    # (r-gate, Wg dead), leaving hg_new = (1 - z_g) * tanh(W_in @ hp).
    geo = dot(hp, w_geo_ref[...])               # (1, 2H) = [z_g | n_g] pre-acts
    z_g = jax.nn.sigmoid(geo[:, 0:H])
    n_g = jnp.tanh(geo[:, H:2 * H])
    hg_new = (1.0 - z_g) * n_g

    out_ref[:, 0:H] = hp
    out_ref[:, H:2 * H] = hg_new


def sggru_forward(x, params, h_syn, hg):
    """Functional SGGRU.forward.  Returns (hp, hg_new); the PyTorch module
    returns hp and stores hp / hg_new as mutable module state.
    # TODO(synk): PyTorch mutates self.h / self.hp / self.hg in place; state is
    # threaded functionally (returned) here instead.
    # TODO(synk): if driven over a time sequence, hoist the step loop into a
    # grid=(T,) pallas_call (constant-index weight BlockSpecs + VMEM-carried
    # state) so the weights are DMA'd once instead of once per step.
    """
    f32, bf16 = jnp.float32, jnp.bfloat16
    H = params["w_xz"].shape[0]
    Din = x.shape[0]
    t = lambda w: jnp.asarray(w, f32).T                     # (out,in) -> (in,out)

    x2 = jnp.asarray(x, f32).reshape(1, Din)
    state = jnp.concatenate(
        [jnp.asarray(h_syn, f32).reshape(1, H),
         jnp.asarray(hg, f32).reshape(1, H)], axis=1)       # (1, 2H)

    # Fused SGGRUCell weights; gate columns ordered [z | r | n].
    w_filt = jnp.concatenate(
        [t(params["w_xz"]), t(params["w_xr"]), t(params["w_xn"])], axis=1)
    w_state = jnp.concatenate([
        jnp.concatenate([t(params["w_hz"]), t(params["w_hr"]),
                         jnp.zeros((H, H), f32)], axis=1),   # h-row block (no h->n matmul)
        jnp.concatenate([t(params["w_gpz"]), t(params["w_gpr"]),
                         t(params["w_gpn"])], axis=1),       # hg-row block
    ], axis=0)                                               # (2H, 3H)

    # nn.GRUCell weight_ih is (3H, H) chunked (r, z, n).  With hx=None the
    # r-gate and all hidden projections (Wg) are dead; keep only [z | n].
    w_ih = jnp.asarray(params["w_ih"], f32)
    w_geo = jnp.concatenate([w_ih[H:2 * H].T, w_ih[2 * H:3 * H].T], axis=1)

    vmem = pl.BlockSpec(memory_space=pltpu.MemorySpace.VMEM)
    out = pl.pallas_call(
        _sggru_kernel,
        out_shape=jax.ShapeDtypeStruct((1, 2 * H), f32),
        in_specs=[vmem] * 6,
        out_specs=vmem,
    )(x2, t(params["w_mlp"]).astype(bf16), state,
      w_filt.astype(bf16), w_state.astype(bf16), w_geo.astype(bf16))
    return out[0, :H], out[0, H:]


def _reference(x, params, h_syn, hg):
    """Pure-JAX mirror of the PyTorch math (W @ vector convention), computed at
    HIGHEST matmul precision as the accuracy baseline."""
    mv = lambda W, v: jnp.matmul(W, v, precision=jax.lax.Precision.HIGHEST)
    H = params["w_xz"].shape[0]
    filt = jnp.tanh(mv(params["w_mlp"], x))
    z = jax.nn.sigmoid(mv(params["w_xz"], filt) + mv(params["w_hz"], h_syn)
                       + mv(params["w_gpz"], hg))
    r = jax.nn.sigmoid(mv(params["w_xr"], filt) + mv(params["w_hr"], h_syn)
                       + mv(params["w_gpr"], hg))
    n = jnp.tanh(mv(params["w_xn"], filt) + mv(params["w_gpn"], hg) + r * h_syn)
    hp = (1.0 - z) * h_syn + z * n
    # nn.GRUCell(hp, hx=None), bias=False, weight_hh = cat(Wg, Wg, Wg)
    hx = jnp.zeros((H,), jnp.float32)
    w_ih = params["w_ih"]
    w_ir, w_iz, w_in = w_ih[:H], w_ih[H:2 * H], w_ih[2 * H:]
    wg_h = mv(params["wg"], hx)
    r_g = jax.nn.sigmoid(mv(w_ir, hp) + wg_h)
    z_g = jax.nn.sigmoid(mv(w_iz, hp) + wg_h)
    n_g = jnp.tanh(mv(w_in, hp) + r_g * wg_h)
    hg_new = (1.0 - z_g) * n_g + z_g * hx
    return hp, hg_new


if __name__ == "__main__":
    # Lane-aligned hidden size keeps every fused-gate slice / packed store on
    # 128-lane tile boundaries (no masked partial accesses).
    input_size, hidden_size = 64, 128
    key = jax.random.PRNGKey(0)
    keys = jax.random.split(key, 16)

    u01 = lambda k, shape: jax.random.uniform(k, shape, jnp.float32)            # torch.rand
    uk = lambda k, shape, fan: jax.random.uniform(
        k, shape, jnp.float32, -1.0 / jnp.sqrt(fan), 1.0 / jnp.sqrt(fan))       # default nn init

    params = {
        # mlp Linear(input_size, hidden_size, bias=False)
        "w_mlp": uk(keys[0], (hidden_size, input_size), float(input_size)),
        # SGGRUCell (input_size == hidden_size) — torch.rand init
        "w_xz": u01(keys[1], (hidden_size, hidden_size)),
        "w_hz": u01(keys[2], (hidden_size, hidden_size)),
        "w_gpz": u01(keys[3], (hidden_size, hidden_size)),
        "w_xr": u01(keys[4], (hidden_size, hidden_size)),
        "w_hr": u01(keys[5], (hidden_size, hidden_size)),
        "w_gpr": u01(keys[6], (hidden_size, hidden_size)),
        "w_xn": u01(keys[7], (hidden_size, hidden_size)),
        "w_gpn": u01(keys[8], (hidden_size, hidden_size)),
        # nn.GRUCell weight_ih (3H, H) and the user-supplied Wg (weight_hh block;
        # dead in the kernel since hx=None, kept for the reference).
        "w_ih": uk(keys[9], (3 * hidden_size, hidden_size), float(hidden_size)),
        "wg": uk(keys[10], (hidden_size, hidden_size), float(hidden_size)),
    }

    # Tolerances account for bf16 MXU operands (f32 accumulation) in the kernel.
    RTOL, ATOL = 2e-2, 3e-2

    # --- step 1: module-init zero state (SGGRUCell.h / SGGRU.hg = zeros) -----
    x1 = u01(keys[11], (input_size,))
    h0 = jnp.zeros((hidden_size,), jnp.float32)
    hg0 = jnp.zeros((hidden_size,), jnp.float32)
    hp1, hg1 = sggru_forward(x1, params, h0, hg0)
    jax.block_until_ready((hp1, hg1))
    hp1_ref, hg1_ref = _reference(x1, params, h0, hg0)
    assert hp1.shape == (hidden_size,) and hg1.shape == (hidden_size,)
    assert jnp.allclose(hp1, hp1_ref, rtol=RTOL, atol=ATOL)
    assert jnp.allclose(hg1, hg1_ref, rtol=RTOL, atol=ATOL)

    # --- step 2: non-zero carried state (exercises the fused [h|hg] block) ---
    x2 = u01(keys[12], (input_size,))
    h_prev = jax.random.uniform(keys[13], (hidden_size,), jnp.float32, -1.0, 1.0)
    hg_prev = jax.random.uniform(keys[14], (hidden_size,), jnp.float32, -1.0, 1.0)
    hp2, hg2 = sggru_forward(x2, params, h_prev, hg_prev)
    jax.block_until_ready((hp2, hg2))
    hp2_ref, hg2_ref = _reference(x2, params, h_prev, hg_prev)
    assert jnp.allclose(hp2, hp2_ref, rtol=RTOL, atol=ATOL)
    assert jnp.allclose(hg2, hg2_ref, rtol=RTOL, atol=ATOL)

    print("KERNEL_OK")
</pallas_src>

<mosaic_0001>
module attributes {stable_mosaic.version = 11 : i64} {
  func.func @_sggru_kernel(%arg0: memref<1x64xf32, #tpu.memory_space<vmem>>, %arg1: memref<64x128xbf16, #tpu.memory_space<vmem>>, %arg2: memref<1x256xf32, #tpu.memory_space<vmem>>, %arg3: memref<128x384xbf16, #tpu.memory_space<vmem>>, %arg4: memref<256x384xbf16, #tpu.memory_space<vmem>>, %arg5: memref<128x256xbf16, #tpu.memory_space<vmem>>, %arg6: memref<1x256xf32, #tpu.memory_space<vmem>>) attributes {dimension_semantics = [], scalar_prefetch = 0 : i64, scratch_operands = 0 : i64, tpu.core_type = #tpu.core_type<tc>} {
    %c0 = arith.constant 0 : index
    %c0_0 = arith.constant 0 : index
    %0 = vector.load %arg2[%c0, %c0_0] : memref<1x256xf32, #tpu.memory_space<vmem>>, vector<1x256xf32>
    %1 = vector.extract_strided_slice %0 {offsets = [0, 0], sizes = [1, 128], strides = [1, 1]} : vector<1x256xf32> to vector<1x128xf32>
    %c0_1 = arith.constant 0 : index
    %c0_2 = arith.constant 0 : index
    %2 = vector.load %arg0[%c0_1, %c0_2] : memref<1x64xf32, #tpu.memory_space<vmem>>, vector<1x64xf32>
    %c0_3 = arith.constant 0 : index
    %c0_4 = arith.constant 0 : index
    %3 = vector.load %arg1[%c0_3, %c0_4] : memref<64x128xbf16, #tpu.memory_space<vmem>>, vector<64x128xbf16>
    %4 = arith.truncf %2 : vector<1x64xf32> to vector<1x64xbf16>
    %cst = arith.constant dense<0.000000e+00> : vector<1x128xf32>
    %5 = tpu.matmul %4, %3, %cst {dimension_numbers = #tpu.dot_dimension_numbers<[1], [0], [0], [1], [0, 0, 1, 1], [], []>} : vector<1x64xbf16>, vector<64x128xbf16>, vector<1x128xf32> -> vector<1x128xf32>
    %6 = math.tanh %5 : vector<1x128xf32>
    %c0_5 = arith.constant 0 : index
    %c0_6 = arith.constant 0 : index
    %7 = vector.load %arg3[%c0_5, %c0_6] : memref<128x384xbf16, #tpu.memory_space<vmem>>, vector<128x384xbf16>
    %8 = arith.truncf %6 : vector<1x128xf32> to vector<1x128xbf16>
    %cst_7 = arith.constant dense<0.000000e+00> : vector<1x384xf32>
    %9 = tpu.matmul %8, %7, %cst_7 {dimension_numbers = #tpu.dot_dimension_numbers<[1], [0], [0], [1], [0, 0, 1, 1], [], []>} : vector<1x128xbf16>, vector<128x384xbf16>, vector<1x384xf32> -> vector<1x384xf32>
    %c0_8 = arith.constant 0 : index
    %c0_9 = arith.constant 0 : index
    %10 = vector.load %arg4[%c0_8, %c0_9] : memref<256x384xbf16, #tpu.memory_space<vmem>>, vector<256x384xbf16>
    %11 = arith.truncf %0 : vector<1x256xf32> to vector<1x256xbf16>
    %cst_10 = arith.constant dense<0.000000e+00> : vector<1x384xf32>
    %12 = tpu.matmul %11, %10, %cst_10 {dimension_numbers = #tpu.dot_dimension_numbers<[1], [0], [0], [1], [0, 0, 1, 1], [], []>} : vector<1x256xbf16>, vector<256x384xbf16>, vector<1x384xf32> -> vector<1x384xf32>
    %13 = arith.addf %9, %12 : vector<1x384xf32>
    %14 = vector.extract_strided_slice %13 {offsets = [0, 0], sizes = [1, 128], strides = [1, 1]} : vector<1x384xf32> to vector<1x128xf32>
    %15 = arith.negf %14 : vector<1x128xf32>
    %16 = math.exp %15 : vector<1x128xf32>
    %cst_11 = arith.constant 1.000000e+00 : f32
    %17 = vector.broadcast %cst_11 : f32 to vector<1x128xf32>
    %18 = arith.addf %17, %16 : vector<1x128xf32>
    %19 = arith.divf %17, %18 : vector<1x128xf32>
    %20 = vector.extract_strided_slice %13 {offsets = [0, 128], sizes = [1, 128], strides = [1, 1]} : vector<1x384xf32> to vector<1x128xf32>
    %21 = arith.negf %20 : vector<1x128xf32>
    %22 = math.exp %21 : vector<1x128xf32>
    %cst_12 = arith.constant 1.000000e+00 : f32
    %23 = vector.broadcast %cst_12 : f32 to vector<1x128xf32>
    %24 = arith.addf %23, %22 : vector<1x128xf32>
    %25 = arith.divf %23, %24 : vector<1x128xf32>
    %26 = vector.extract_strided_slice %13 {offsets = [0, 256], sizes = [1, 128], strides = [1, 1]} : vector<1x384xf32> to vector<1x128xf32>
    %27 = arith.mulf %25, %1 : vector<1x128xf32>
    %28 = arith.addf %26, %27 : vector<1x128xf32>
    %29 = math.tanh %28 : vector<1x128xf32>
    %cst_13 = arith.constant 1.000000e+00 : f32
    %30 = vector.broadcast %cst_13 : f32 to vector<1x128xf32>
    %31 = arith.subf %30, %19 : vector<1x128xf32>
    %32 = arith.mulf %31, %1 : vector<1x128xf32>
    %33 = arith.mulf %19, %29 : vector<1x128xf32>
    %34 = arith.addf %32, %33 : vector<1x128xf32>
    %c0_14 = arith.constant 0 : index
    %c0_15 = arith.constant 0 : index
    %35 = vector.load %arg5[%c0_14, %c0_15] : memref<128x256xbf16, #tpu.memory_space<vmem>>, vector<128x256xbf16>
    %36 = arith.truncf %34 : vector<1x128xf32> to vector<1x128xbf16>
    %cst_16 = arith.constant dense<0.000000e+00> : vector<1x256xf32>
    %37 = tpu.matmul %36, %35, %cst_16 {dimension_numbers = #tpu.dot_dimension_numbers<[1], [0], [0], [1], [0, 0, 1, 1], [], []>} : vector<1x128xbf16>, vector<128x256xbf16>, vector<1x256xf32> -> vector<1x256xf32>
    %38 = vector.extract_strided_slice %37 {offsets = [0, 0], sizes = [1, 128], strides = [1, 1]} : vector<1x256xf32> to vector<1x128xf32>
    %39 = arith.negf %38 : vector<1x128xf32>
    %40 = math.exp %39 : vector<1x128xf32>
    %cst_17 = arith.constant 1.000000e+00 : f32
    %41 = vector.broadcast %cst_17 : f32 to vector<1x128xf32>
    %42 = arith.addf %41, %40 : vector<1x128xf32>
    %43 = arith.divf %41, %42 : vector<1x128xf32>
    %44 = vector.extract_strided_slice %37 {offsets = [0, 128], sizes = [1, 128], strides = [1, 1]} : vector<1x256xf32> to vector<1x128xf32>
    %45 = math.tanh %44 : vector<1x128xf32>
    %cst_18 = arith.constant 1.000000e+00 : f32
    %46 = vector.broadcast %cst_18 : f32 to vector<1x128xf32>
    %47 = arith.subf %46, %43 : vector<1x128xf32>
    %48 = arith.mulf %47, %45 : vector<1x128xf32>
    %c0_19 = arith.constant 0 : index
    %c0_20 = arith.constant 0 : index
    %49 = vector.load %arg6[%c0_19, %c0_20] : memref<1x256xf32, #tpu.memory_space<vmem>>, vector<1x128xf32>
    tpu.vector_store %arg6[%c0_19, %c0_20], %34 {strides = array<i32>} : memref<1x256xf32, #tpu.memory_space<vmem>>, vector<1x128xf32>,
    %c0_21 = arith.constant 0 : index
    %c128 = arith.constant 128 : index
    %50 = vector.load %arg6[%c0_21, %c128] : memref<1x256xf32, #tpu.memory_space<vmem>>, vector<1x128xf32>
    tpu.vector_store %arg6[%c0_21, %c128], %48 {strides = array<i32>} : memref<1x256xf32, #tpu.memory_space<vmem>>, vector<1x128xf32>,
    return
  }
}

</mosaic_0001>

<llo_original>
// kernel: tpu_custom_call.1
$region0: #{tpu_custom_call.1}
  #allocation0 [shape = 'u32[]', space=smem, size = 0x4, offset = 0x4, fixed_abs, tag = 'smem constant byte address 0x4 - core index']
  #allocation1 [shape = 'u32[72,128]{1,0:T(1,128)}', space=vmem, size = 0x9000, scoped, tag = 'internal scratch']
  %s0 = inlined_call_operand.hbm [shape: f32[1,64], index: 0, kind: input, shape index: {}]
  %s1 = inlined_call_operand.hbm [shape: bf16[64,128], index: 1, kind: input, shape index: {}]
  %s2 = inlined_call_operand.hbm [shape: f32[1,256], index: 2, kind: input, shape index: {}]
  %s3 = inlined_call_operand.hbm [shape: bf16[128,384], index: 3, kind: input, shape index: {}]
  %s4 = inlined_call_operand.hbm [shape: bf16[256,384], index: 4, kind: input, shape index: {}]
  %s5 = inlined_call_operand.hbm [shape: bf16[128,256], index: 5, kind: input, shape index: {}]
  %s6 = inlined_call_operand.hbm [shape: f32[1,256], index: 6, kind: output, shape index: {}]
  %s7 = sld [smem:[#allocation0]]
  $region58: #{tpu_custom_call.1} parent=0
    _
  %s9 = ssub.s32 1, %s7
  %s10 = scalar_select 0, %s9, %s7
  $region1: #{tpu_custom_call.1} parent=0
    #allocation2 [shape = 'u8[512]{0}', space=vmem, size = 0x400, scoped, tag = 'input window, operand 0, single buffered']
    #allocation3 [shape = 's32[1]{0}', space=sflag, size = 0x4, scoped, tag = 'scoped memory for tpu_custom_call.1']
    #allocation4 [shape = 's32[1]{0}', space=sflag, size = 0x4, scoped, tag = 'scoped memory for tpu_custom_call.1']
    #allocation5 [shape = 'u8[16384]{0}', space=vmem, size = 0x4000, scoped, tag = 'input window, operand 1, single buffered']
    #allocation6 [shape = 's32[1]{0}', space=sflag, size = 0x4, scoped, tag = 'scoped memory for tpu_custom_call.1']
    #allocation7 [shape = 'u8[1024]{0}', space=vmem, size = 0x400, scoped, tag = 'input window, operand 2, single buffered']
    #allocation8 [shape = 'u8[98304]{0}', space=vmem, size = 0x18000, scoped, tag = 'input window, operand 3, single buffered']
    #allocation9 [shape = 's32[1]{0}', space=sflag, size = 0x4, scoped, tag = 'scoped memory for tpu_custom_call.1']
    #allocation10 [shape = 'u8[196608]{0}', space=vmem, size = 0x30000, scoped, tag = 'input window, operand 4, single buffered']
    #allocation11 [shape = 'u8[65536]{0}', space=vmem, size = 0x10000, scoped, tag = 'input window, operand 5, single buffered']
    #allocation12 [shape = 's32[1]{0}', space=sflag, size = 0x4, scoped, tag = 'scoped memory for tpu_custom_call.1']
    #allocation13 [shape = 'u8[1024]{0}', space=vmem, size = 0x400, scoped, tag = 'output window, operand 0, single buffered']
    %11 = vsyncpa [#allocation3], 0
    %12 = vsyncpa [#allocation6], 0
    %13 = vsyncpa [#allocation9], 0
    %14 = vsyncpa [#allocation12], 0
    %15 = vsyncpa [#allocation4], 0
    // Predicated region
    $region2: #{tpu_custom_call.1} parent=1 // pred_check
      _
    $region3: #{tpu_custom_call.1} parent=1 // pred_check_branch
      %17 = sbr.rel (0) target = $region5
    $region4: #{tpu_custom_call.1} parent=1 // pred_region
      %19 = vsyncadd [#allocation3], 0
      %s21 = sshll.u32 %s0, 4
      %s22 = int_to_ptr.hbm [resolvable:$true] %s21
      %s23 = sshll.u32 [#allocation2], 4
      %s24 = int_to_ptr.vmem [resolvable:$true] %s23
      %26 = dma.hbm_to_vmem [thread:$0]  %s22, 16, %s24, [#allocation3]
    $region5: #{tpu_custom_call.1} parent=1 // pred_fallthru
      _
    // Predicated region
    $region6: #{tpu_custom_call.1} parent=1 // pred_check
      _
    $region7: #{tpu_custom_call.1} parent=1 // pred_check_branch
      %28 = sbr.rel (0) target = $region9
    $region8: #{tpu_custom_call.1} parent=1 // pred_region
      %30 = vsyncadd [#allocation6], 0
      %s31 = sshll.u32 %s1, 4
      %s32 = int_to_ptr.hbm [resolvable:$true] %s31
      %s33 = sshll.u32 [#allocation5], 4
      %s34 = int_to_ptr.vmem [resolvable:$true] %s33
      %39 = dma.hbm_to_vmem [thread:$0]  %s32, 512, %s34, [#allocation6], 64, 64, 4
    $region9: #{tpu_custom_call.1} parent=1 // pred_fallthru
      _
    // Predicated region
    $region10: #{tpu_custom_call.1} parent=1 // pred_check
      _
    $region11: #{tpu_custom_call.1} parent=1 // pred_check_branch
      %41 = sbr.rel (0) target = $region13
    $region12: #{tpu_custom_call.1} parent=1 // pred_region
      %43 = vsyncadd [#allocation6], 0
      %s45 = sshll.u32 %s2, 4
      %s46 = int_to_ptr.hbm [resolvable:$true] %s45
      %s47 = sshll.u32 [#allocation7], 4
      %s48 = int_to_ptr.vmem [resolvable:$true] %s47
      %50 = dma.hbm_to_vmem [thread:$0]  %s46, 32, %s48, [#allocation6]
    $region13: #{tpu_custom_call.1} parent=1 // pred_fallthru
      _
    // Predicated region
    $region14: #{tpu_custom_call.1} parent=1 // pred_check
      _
    $region15: #{tpu_custom_call.1} parent=1 // pred_check_branch
      %52 = sbr.rel (0) target = $region17
    $region16: #{tpu_custom_call.1} parent=1 // pred_region
      %54 = vsyncadd [#allocation9], 0
      %s55 = sshll.u32 %s3, 4
      %s56 = int_to_ptr.hbm [resolvable:$true] %s55
      %s57 = sshll.u32 [#allocation8], 4
      %s58 = int_to_ptr.vmem [resolvable:$true] %s57
      %63 = dma.hbm_to_vmem [thread:$0]  %s56, 3072, %s58, [#allocation9], 192, 192, 12
    $region17: #{tpu_custom_call.1} parent=1 // pred_fallthru
      _
    // Predicated region
    $region18: #{tpu_custom_call.1} parent=1 // pred_check
      _
    $region19: #{tpu_custom_call.1} parent=1 // pred_check_branch
      %65 = sbr.rel (0) target = $region21
    $region20: #{tpu_custom_call.1} parent=1 // pred_region
      %67 = vsyncadd [#allocation9], 0
      %s68 = sshll.u32 %s4, 4
      %s69 = int_to_ptr.hbm [resolvable:$true] %s68
      %s70 = sshll.u32 [#allocation10], 4
      %s71 = int_to_ptr.vmem [resolvable:$true] %s70
      %76 = dma.hbm_to_vmem [thread:$0]  %s69, 6144, %s71, [#allocation9], 192, 192, 12
    $region21: #{tpu_custom_call.1} parent=1 // pred_fallthru
      _
    // Predicated region
    $region22: #{tpu_custom_call.1} parent=1 // pred_check
      _
    $region23: #{tpu_custom_call.1} parent=1 // pred_check_branch
      %78 = sbr.rel (0) target = $region25
    $region24: #{tpu_custom_call.1} parent=1 // pred_region
      %80 = vsyncadd [#allocation12], 0
      %s81 = sshll.u32 %s5, 4
      %s82 = int_to_ptr.hbm [resolvable:$true] %s81
      %s83 = sshll.u32 [#allocation11], 4
      %s84 = int_to_ptr.vmem [resolvable:$true] %s83
      %89 = dma.hbm_to_vmem [thread:$0]  %s82, 2048, %s84, [#allocation12], 128, 128, 8
    $region25: #{tpu_custom_call.1} parent=1 // pred_fallthru
      _
    // Predicated region
    $region26: #{tpu_custom_call.1} parent=1 // pred_check
      _
    $region27: #{tpu_custom_call.1} parent=1 // pred_check_branch
      %91 = sbr.rel (0) target = $region29
    $region28: #{tpu_custom_call.1} parent=1 // pred_region
      %93 = dma.done [#allocation3], 16
    $region29: #{tpu_custom_call.1} parent=1 // pred_fallthru
      _
    // Predicated region
    $region30: #{tpu_custom_call.1} parent=1 // pred_check
      _
    $region31: #{tpu_custom_call.1} parent=1 // pred_check_branch
      %95 = sbr.rel (0) target = $region33
    $region32: #{tpu_custom_call.1} parent=1 // pred_region
      %97 = dma.done [#allocation6], 512
    $region33: #{tpu_custom_call.1} parent=1 // pred_fallthru
      _
    // Predicated region
    $region34: #{tpu_custom_call.1} parent=1 // pred_check
      _
    $region35: #{tpu_custom_call.1} parent=1 // pred_check_branch
      %99 = sbr.rel (0) target = $region37
    $region36: #{tpu_custom_call.1} parent=1 // pred_region
      %101 = dma.done [#allocation6], 32
    $region37: #{tpu_custom_call.1} parent=1 // pred_fallthru
      _
    // Predicated region
    $region38: #{tpu_custom_call.1} parent=1 // pred_check
      _
    $region39: #{tpu_custom_call.1} parent=1 // pred_check_branch
      %103 = sbr.rel (0) target = $region41
    $region40: #{tpu_custom_call.1} parent=1 // pred_region
      %105 = dma.done [#allocation9], 3072
    $region41: #{tpu_custom_call.1} parent=1 // pred_fallthru
      _
    // Predicated region
    $region42: #{tpu_custom_call.1} parent=1 // pred_check
      _
    $region43: #{tpu_custom_call.1} parent=1 // pred_check_branch
      %107 = sbr.rel (0) target = $region45
    $region44: #{tpu_custom_call.1} parent=1 // pred_region
      %109 = dma.done [#allocation9], 6144
    $region45: #{tpu_custom_call.1} parent=1 // pred_fallthru
      _
    // Predicated region
    $region46: #{tpu_custom_call.1} parent=1 // pred_check
      _
    $region47: #{tpu_custom_call.1} parent=1 // pred_check_branch
      %111 = sbr.rel (0) target = $region49
    $region48: #{tpu_custom_call.1} parent=1 // pred_region
      %113 = dma.done [#allocation12], 2048
    $region49: #{tpu_custom_call.1} parent=1 // pred_fallthru
      _
    %v115 = vld [vmem:[#allocation7] sm:$0x3]
    %v116 = vld [vmem:[#allocation2] sm:$0x1]
    %v117 = vld [vmem:[#allocation5] sm:$0xf]
    %v118 = vld [vmem:[#allocation5 + $0x4] sm:$0xf]
    %v119 = vld [vmem:[#allocation5 + $0x8] sm:$0xf]
    %v120 = vld [vmem:[#allocation5 + $0xc] sm:$0xf]
    %v121 = vld [vmem:[#allocation5 + $0x10] sm:$0xf]
    %v122 = vld [vmem:[#allocation5 + $0x14] sm:$0xf]
    %v123 = vld [vmem:[#allocation5 + $0x18] sm:$0xf]
    %v124 = vld [vmem:[#allocation5 + $0x1c] sm:$0xf]
    %v125 = vpack.c.bf16 %v116, %v116
    %v134 = vunpack.c.l.b16 %v117
    %v135 = vunpack.c.l.b16 %v118
    %v136 = vunpack.c.l.b16 %v119
    %v137 = vunpack.c.l.b16 %v120
    %v138 = vunpack.c.l.b16 %v121
    %v139 = vunpack.c.l.b16 %v122
    %v140 = vunpack.c.l.b16 %v123
    %v141 = vunpack.c.l.b16 %v124
    %v142 = vpack.c.b16 %v135, %v134
    %v143 = vpack.c.b16 %v137, %v136
    %v144 = vpack.c.b16 %v139, %v138
    %v145 = vpack.c.b16 %v141, %v140
    %vm150 = vcmask 523264
    %v152 = vsel %vm150, %v125, 0
    %154 = vmatpush.bf16.msra.mxu0 0
    %155 = vmatpush.bf16.msra.mxu0 0
    %156 = vmatpush.bf16.msra.mxu0 0
    %157 = vmatpush.bf16.msra.mxu0 0
    %158 = vmatpush.bf16.msra.mxu0 %v145
    %159 = vmatpush.bf16.msra.mxu0 %v144
    %160 = vmatpush.bf16.msra.mxu0 %v143
    %161 = vmatpush.bf16.msra.mxu0 %v142
    %162 = vmatmul.bf16.gmra.mxu0 %v152
    %v163 = vpop.f32.mrf.mxu0
    %v164 = vadd.f32 0.0, %v163
    %v165 = vpop.f32.mrf.mxu0
    %166 = vdwg.mxu0
    %v167 = vtanh.pop %v164
    %v168 = vld [vmem:[#allocation8] sm:$0xff]
    %v169 = vld [vmem:[#allocation8 + $0x8] sm:$0xf]
    %v170 = vld [vmem:[#allocation8 + $0xc] sm:$0xff]
    %v171 = vld [vmem:[#allocation8 + $0x14] sm:$0xf]
    %v172 = vld [vmem:[#allocation8 + $0x18] sm:$0xff]
    %v173 = vld [vmem:[#allocation8 + $0x20] sm:$0xf]
    %v174 = vld [vmem:[#allocation8 + $0x24] sm:$0xff]
    %v175 = vld [vmem:[#allocation8 + $0x2c] sm:$0xf]
    %v176 = vld [vmem:[#allocation8 + $0x30] sm:$0xff]
    %v177 = vld [vmem:[#allocation8 + $0x38] sm:$0xf]
    %v178 = vld [vmem:[#allocation8 + $0x3c] sm:$0xff]
    %v179 = vld [vmem:[#allocation8 + $0x44] sm:$0xf]
    %v180 = vld [vmem:[#allocation8 + $0x48] sm:$0xff]
    %v181 = vld [vmem:[#allocation8 + $0x50] sm:$0xf]
    %v182 = vld [vmem:[#allocation8 + $0x54] sm:$0xff]
    %v183 = vld [vmem:[#allocation8 + $0x5c] sm:$0xf]
    %v184 = vld [vmem:[#allocation8 + $0x60] sm:$0xff]
    %v185 = vld [vmem:[#allocation8 + $0x68] sm:$0xf]
    %v186 = vld [vmem:[#allocation8 + $0x6c] sm:$0xff]
    %v187 = vld [vmem:[#allocation8 + $0x74] sm:$0xf]
    %v188 = vld [vmem:[#allocation8 + $0x78] sm:$0xff]
    %v189 = vld [vmem:[#allocation8 + $0x80] sm:$0xf]
    %v190 = vld [vmem:[#allocation8 + $0x84] sm:$0xff]
    %v191 = vld [vmem:[#allocation8 + $0x8c] sm:$0xf]
    %v192 = vld [vmem:[#allocation8 + $0x90] sm:$0xff]
    %v193 = vld [vmem:[#allocation8 + $0x98] sm:$0xf]
    %v194 = vld [vmem:[#allocation8 + $0x9c] sm:$0xff]
    %v195 = vld [vmem:[#allocation8 + $0xa4] sm:$0xf]
    %v196 = vld [vmem:[#allocation8 + $0xa8] sm:$0xff]
    %v197 = vld [vmem:[#allocation8 + $0xb0] sm:$0xf]
    %v198 = vld [vmem:[#allocation8 + $0xb4] sm:$0xff]
    %v199 = vld [vmem:[#allocation8 + $0xbc] sm:$0xf]
    %v200 = vpack.c.bf16 %v167, %v167
    %v201 = vld [vmem:[#allocation10] sm:$0xff]
    %v202 = vld [vmem:[#allocation10 + $0x8] sm:$0xf]
    %v203 = vld [vmem:[#allocation10 + $0xc] sm:$0xff]
    %v204 = vld [vmem:[#allocation10 + $0x14] sm:$0xf]
    %v205 = vld [vmem:[#allocation10 + $0x18] sm:$0xff]
    %v206 = vld [vmem:[#allocation10 + $0x20] sm:$0xf]
    %v207 = vld [vmem:[#allocation10 + $0x24] sm:$0xff]
    %v208 = vld [vmem:[#allocation10 + $0x2c] sm:$0xf]
    %v209 = vld [vmem:[#allocation10 + $0x30] sm:$0xff]
    %v210 = vld [vmem:[#allocation10 + $0x38] sm:$0xf]
    %v211 = vld [vmem:[#allocation10 + $0x3c] sm:$0xff]
    %v212 = vld [vmem:[#allocation10 + $0x44] sm:$0xf]
    %v213 = vld [vmem:[#allocation10 + $0x48] sm:$0xff]
    %v214 = vld [vmem:[#allocation10 + $0x50] sm:$0xf]
    %v215 = vld [vmem:[#allocation10 + $0x54] sm:$0xff]
    %v216 = vld [vmem:[#allocation10 + $0x5c] sm:$0xf]
    %v217 = vld [vmem:[#allocation10 + $0x60] sm:$0xff]
    %v218 = vld [vmem:[#allocation10 + $0x68] sm:$0xf]
    %v219 = vld [vmem:[#allocation10 + $0x6c] sm:$0xff]
    %v220 = vld [vmem:[#allocation10 + $0x74] sm:$0xf]
    %v221 = vld [vmem:[#allocation10 + $0x78] sm:$0xff]
    %v222 = vld [vmem:[#allocation10 + $0x80] sm:$0xf]
    %v223 = vld [vmem:[#allocation10 + $0x84] sm:$0xff]
    %v224 = vld [vmem:[#allocation10 + $0x8c] sm:$0xf]
    %v225 = vld [vmem:[#allocation10 + $0x90] sm:$0xff]
    %v226 = vld [vmem:[#allocation10 + $0x98] sm:$0xf]
    %v227 = vld [vmem:[#allocation10 + $0x9c] sm:$0xff]
    %v228 = vld [vmem:[#allocation10 + $0xa4] sm:$0xf]
    %v229 = vld [vmem:[#allocation10 + $0xa8] sm:$0xff]
    %v230 = vld [vmem:[#allocation10 + $0xb0] sm:$0xf]
    %v231 = vld [vmem:[#allocation10 + $0xb4] sm:$0xff]
    %v232 = vld [vmem:[#allocation10 + $0xbc] sm:$0xf]
    %v233 = vld [vmem:[#allocation10 + $0xc0] sm:$0xff]
    %v234 = vld [vmem:[#allocation10 + $0xc8] sm:$0xf]
    %v235 = vld [vmem:[#allocation10 + $0xcc] sm:$0xff]
    %v236 = vld [vmem:[#allocation10 + $0xd4] sm:$0xf]
    %v237 = vld [vmem:[#allocation10 + $0xd8] sm:$0xff]
    %v238 = vld [vmem:[#allocation10 + $0xe0] sm:$0xf]
    %v239 = vld [vmem:[#allocation10 + $0xe4] sm:$0xff]
    %v240 = vld [vmem:[#allocation10 + $0xec] sm:$0xf]
    %v241 = vld [vmem:[#allocation10 + $0xf0] sm:$0xff]
    %v242 = vld [vmem:[#allocation10 + $0xf8] sm:$0xf]
    %v243 = vld [vmem:[#allocation10 + $0xfc] sm:$0xff]
    %v244 = vld [vmem:[#allocation10 + $0x104] sm:$0xf]
    %v245 = vld [vmem:[#allocation10 + $0x108] sm:$0xff]
    %v246 = vld [vmem:[#allocation10 + $0x110] sm:$0xf]
    %v247 = vld [vmem:[#allocation10 + $0x114] sm:$0xff]
    %v248 = vld [vmem:[#allocation10 + $0x11c] sm:$0xf]
    %v249 = vld [vmem:[#allocation10 + $0x120] sm:$0xff]
    %v250 = vld [vmem:[#allocation10 + $0x128] sm:$0xf]
    %v251 = vld [vmem:[#allocation10 + $0x12c] sm:$0xff]
    %v252 = vld [vmem:[#allocation10 + $0x134] sm:$0xf]
    %v253 = vld [vmem:[#allocation10 + $0x138] sm:$0xff]
    %v254 = vld [vmem:[#allocation10 + $0x140] sm:$0xf]
    %v255 = vld [vmem:[#allocation10 + $0x144] sm:$0xff]
    %v256 = vld [vmem:[#allocation10 + $0x14c] sm:$0xf]
    %v257 = vld [vmem:[#allocation10 + $0x150] sm:$0xff]
    %v258 = vld [vmem:[#allocation10 + $0x158] sm:$0xf]
    %v259 = vld [vmem:[#allocation10 + $0x15c] sm:$0xff]
    %v260 = vld [vmem:[#allocation10 + $0x164] sm:$0xf]
    %v261 = vld [vmem:[#allocation10 + $0x168] sm:$0xff]
    %v262 = vld [vmem:[#allocation10 + $0x170] sm:$0xf]
    %v263 = vld [vmem:[#allocation10 + $0x174] sm:$0xff]
    %v264 = vld [vmem:[#allocation10 + $0x17c] sm:$0xf]
    %v266 = vperm.slane %v115, 0
    %v267 = vperm.slane %v115, 1
    %v270 = vpack.c.bf16 %v266, %v266
    %v271 = vpack.c.bf16 %v267, %v267
    %v336 = vunpack.c.l.b16 %v201
    %v337 = vunpack.c.h.b16 %v201
    %v338 = vunpack.c.l.b16 %v202
    %v339 = vunpack.c.l.b16 %v203
    %v340 = vunpack.c.h.b16 %v203
    %v341 = vunpack.c.l.b16 %v204
    %v342 = vunpack.c.l.b16 %v205
    %v343 = vunpack.c.h.b16 %v205
    %v344 = vunpack.c.l.b16 %v206
    %v345 = vunpack.c.l.b16 %v207
    %v346 = vunpack.c.h.b16 %v207
    %v347 = vunpack.c.l.b16 %v208
    %v348 = vunpack.c.l.b16 %v209
    %v349 = vunpack.c.h.b16 %v209
    %v350 = vunpack.c.l.b16 %v210
    %v351 = vunpack.c.l.b16 %v211
    %v352 = vunpack.c.h.b16 %v211
    %v353 = vunpack.c.l.b16 %v212
    %v354 = vunpack.c.l.b16 %v213
    %v355 = vunpack.c.h.b16 %v213
    %v356 = vunpack.c.l.b16 %v214
    %v357 = vunpack.c.l.b16 %v215
    %v358 = vunpack.c.h.b16 %v215
    %v359 = vunpack.c.l.b16 %v216
    %v360 = vunpack.c.l.b16 %v217
    %v361 = vunpack.c.h.b16 %v217
    %v362 = vunpack.c.l.b16 %v218
    %v363 = vunpack.c.l.b16 %v219
    %v364 = vunpack.c.h.b16 %v219
    %v365 = vunpack.c.l.b16 %v220
    %v366 = vunpack.c.l.b16 %v221
    %v367 = vunpack.c.h.b16 %v221
    %v368 = vunpack.c.l.b16 %v222
    %v369 = vunpack.c.l.b16 %v223
    %v370 = vunpack.c.h.b16 %v223
    %v371 = vunpack.c.l.b16 %v224
    %v372 = vunpack.c.l.b16 %v225
    %v373 = vunpack.c.h.b16 %v225
    %v374 = vunpack.c.l.b16 %v226
    %v375 = vunpack.c.l.b16 %v227
    %v376 = vunpack.c.h.b16 %v227
    %v377 = vunpack.c.l.b16 %v228
    %v378 = vunpack.c.l.b16 %v229
    %v379 = vunpack.c.h.b16 %v229
    %v380 = vunpack.c.l.b16 %v230
    %v381 = vunpack.c.l.b16 %v231
    %v382 = vunpack.c.h.b16 %v231
    %v383 = vunpack.c.l.b16 %v232
    %v384 = vunpack.c.l.b16 %v233
    %v385 = vunpack.c.h.b16 %v233
    %v386 = vunpack.c.l.b16 %v234
    %v387 = vunpack.c.l.b16 %v235
    %v388 = vunpack.c.h.b16 %v235
    %v389 = vunpack.c.l.b16 %v236
    %v390 = vunpack.c.l.b16 %v237
    %v391 = vunpack.c.h.b16 %v237
    %v392 = vunpack.c.l.b16 %v238
    %v393 = vunpack.c.l.b16 %v239
    %v394 = vunpack.c.h.b16 %v239
    %v395 = vunpack.c.l.b16 %v240
    %v396 = vunpack.c.l.b16 %v241
    %v397 = vunpack.c.h.b16 %v241
    %v398 = vunpack.c.l.b16 %v242
    %v399 = vunpack.c.l.b16 %v243
    %v400 = vunpack.c.h.b16 %v243
    %v401 = vunpack.c.l.b16 %v244
    %v402 = vunpack.c.l.b16 %v245
    %v403 = vunpack.c.h.b16 %v245
    %v404 = vunpack.c.l.b16 %v246
    %v405 = vunpack.c.l.b16 %v247
    %v406 = vunpack.c.h.b16 %v247
    %v407 = vunpack.c.l.b16 %v248
    %v408 = vunpack.c.l.b16 %v249
    %v409 = vunpack.c.h.b16 %v249
    %v410 = vunpack.c.l.b16 %v250
    %v411 = vunpack.c.l.b16 %v251
    %v412 = vunpack.c.h.b16 %v251
    %v413 = vunpack.c.l.b16 %v252
    %v414 = vunpack.c.l.b16 %v253
    %v415 = vunpack.c.h.b16 %v253
    %v416 = vunpack.c.l.b16 %v254
    %v417 = vunpack.c.l.b16 %v255
    %v418 = vunpack.c.h.b16 %v255
    %v419 = vunpack.c.l.b16 %v256
    %v420 = vunpack.c.l.b16 %v257
    %v421 = vunpack.c.h.b16 %v257
    %v422 = vunpack.c.l.b16 %v258
    %v423 = vunpack.c.l.b16 %v259
    %v424 = vunpack.c.h.b16 %v259
    %v425 = vunpack.c.l.b16 %v260
    %v426 = vunpack.c.l.b16 %v261
    %v427 = vunpack.c.h.b16 %v261
    %v428 = vunpack.c.l.b16 %v262
    %v429 = vunpack.c.l.b16 %v263
    %v430 = vunpack.c.h.b16 %v263
    %v431 = vunpack.c.l.b16 %v264
    %v432 = vpack.c.b16 %v339, %v336
    %v433 = vpack.c.b16 %v340, %v337
    %v434 = vpack.c.b16 %v341, %v338
    %v435 = vpack.c.b16 %v345, %v342
    %v436 = vpack.c.b16 %v346, %v343
    %v437 = vpack.c.b16 %v347, %v344
    %v438 = vpack.c.b16 %v351, %v348
    %v439 = vpack.c.b16 %v352, %v349
    %v440 = vpack.c.b16 %v353, %v350
    %v441 = vpack.c.b16 %v357, %v354
    %v442 = vpack.c.b16 %v358, %v355
    %v443 = vpack.c.b16 %v359, %v356
    %v444 = vpack.c.b16 %v363, %v360
    %v445 = vpack.c.b16 %v364, %v361
    %v446 = vpack.c.b16 %v365, %v362
    %v447 = vpack.c.b16 %v369, %v366
    %v448 = vpack.c.b16 %v370, %v367
    %v449 = vpack.c.b16 %v371, %v368
    %v450 = vpack.c.b16 %v375, %v372
    %v451 = vpack.c.b16 %v376, %v373
    %v452 = vpack.c.b16 %v377, %v374
    %v453 = vpack.c.b16 %v381, %v378
    %v454 = vpack.c.b16 %v382, %v379
    %v455 = vpack.c.b16 %v383, %v380
    %v456 = vpack.c.b16 %v387, %v384
    %v457 = vpack.c.b16 %v388, %v385
    %v458 = vpack.c.b16 %v389, %v386
    %v459 = vpack.c.b16 %v393, %v390
    %v460 = vpack.c.b16 %v394, %v391
    %v461 = vpack.c.b16 %v395, %v392
    %v462 = vpack.c.b16 %v399, %v396
    %v463 = vpack.c.b16 %v400, %v397
    %v464 = vpack.c.b16 %v401, %v398
    %v465 = vpack.c.b16 %v405, %v402
    %v466 = vpack.c.b16 %v406, %v403
    %v467 = vpack.c.b16 %v407, %v404
    %v468 = vpack.c.b16 %v411, %v408
    %v469 = vpack.c.b16 %v412, %v409
    %v470 = vpack.c.b16 %v413, %v410
    %v471 = vpack.c.b16 %v417, %v414
    %v472 = vpack.c.b16 %v418, %v415
    %v473 = vpack.c.b16 %v419, %v416
    %v474 = vpack.c.b16 %v423, %v420
    %v475 = vpack.c.b16 %v424, %v421
    %v476 = vpack.c.b16 %v425, %v422
    %v477 = vpack.c.b16 %v429, %v426
    %v478 = vpack.c.b16 %v430, %v427
    %v479 = vpack.c.b16 %v431, %v428
    %528 = vmatpush.bf16.msra.mxu0 %v453
    %529 = vmatpush.bf16.msra.mxu0 %v450
    %530 = vmatpush.bf16.msra.mxu0 %v447
    %531 = vmatpush.bf16.msra.mxu0 %v444
    %532 = vmatpush.bf16.msra.mxu0 %v441
    %533 = vmatpush.bf16.msra.mxu0 %v438
    %534 = vmatpush.bf16.msra.mxu0 %v435
    %535 = vmatpush.bf16.msra.mxu0 %v432
    %536 = vmatmul.bf16.gmra.mxu0 %v270
    %v537 = vpop.f32.mrf.mxu0
    %v538 = vadd.f32 0.0, %v537
    %v539 = vpop.f32.mrf.mxu0
    %540 = vdwg.mxu0
    %541 = vmatpush.bf16.msra.mxu0 %v477
    %542 = vmatpush.bf16.msra.mxu0 %v474
    %543 = vmatpush.bf16.msra.mxu0 %v471
    %544 = vmatpush.bf16.msra.mxu0 %v468
    %545 = vmatpush.bf16.msra.mxu0 %v465
    %546 = vmatpush.bf16.msra.mxu0 %v462
    %547 = vmatpush.bf16.msra.mxu0 %v459
    %548 = vmatpush.bf16.msra.mxu0 %v456
    %549 = vmatmul.bf16.gmra.mxu0 %v271
    %v550 = vpop.f32.mrf.mxu0
    %v551 = vadd.f32 %v538, %v550
    %v552 = vpop.f32.mrf.mxu0
    %553 = vdwg.mxu0
    %554 = vmatpush.bf16.msra.mxu0 %v454
    %555 = vmatpush.bf16.msra.mxu0 %v451
    %556 = vmatpush.bf16.msra.mxu0 %v448
    %557 = vmatpush.bf16.msra.mxu0 %v445
    %558 = vmatpush.bf16.msra.mxu0 %v442
    %559 = vmatpush.bf16.msra.mxu0 %v439
    %560 = vmatpush.bf16.msra.mxu0 %v436
    %561 = vmatpush.bf16.msra.mxu0 %v433
    %562 = vmatmul.bf16.gmra.mxu0 %v270
    %v563 = vpop.f32.mrf.mxu0
    %v564 = vadd.f32 0.0, %v563
    %v565 = vpop.f32.mrf.mxu0
    %566 = vdwg.mxu0
    %567 = vmatpush.bf16.msra.mxu0 %v478
    %568 = vmatpush.bf16.msra.mxu0 %v475
    %569 = vmatpush.bf16.msra.mxu0 %v472
    %570 = vmatpush.bf16.msra.mxu0 %v469
    %571 = vmatpush.bf16.msra.mxu0 %v466
    %572 = vmatpush.bf16.msra.mxu0 %v463
    %573 = vmatpush.bf16.msra.mxu0 %v460
    %574 = vmatpush.bf16.msra.mxu0 %v457
    %575 = vmatmul.bf16.gmra.mxu0 %v271
    %v576 = vpop.f32.mrf.mxu0
    %v577 = vadd.f32 %v564, %v576
    %v578 = vpop.f32.mrf.mxu0
    %579 = vdwg.mxu0
    %580 = vmatpush.bf16.msra.mxu0 %v455
    %581 = vmatpush.bf16.msra.mxu0 %v452
    %582 = vmatpush.bf16.msra.mxu0 %v449
    %583 = vmatpush.bf16.msra.mxu0 %v446
    %584 = vmatpush.bf16.msra.mxu0 %v443
    %585 = vmatpush.bf16.msra.mxu0 %v440
    %586 = vmatpush.bf16.msra.mxu0 %v437
    %587 = vmatpush.bf16.msra.mxu0 %v434
    %588 = vmatmul.bf16.gmra.mxu0 %v270
    %v589 = vpop.f32.mrf.mxu0
    %v590 = vadd.f32 0.0, %v589
    %v591 = vpop.f32.mrf.mxu0
    %592 = vdwg.mxu0
    %593 = vmatpush.bf16.msra.mxu0 %v479
    %594 = vmatpush.bf16.msra.mxu0 %v476
    %595 = vmatpush.bf16.msra.mxu0 %v473
    %596 = vmatpush.bf16.msra.mxu0 %v470
    %597 = vmatpush.bf16.msra.mxu0 %v467
    %598 = vmatpush.bf16.msra.mxu0 %v464
    %599 = vmatpush.bf16.msra.mxu0 %v461
    %600 = vmatpush.bf16.msra.mxu0 %v458
    %601 = vmatmul.bf16.gmra.mxu0 %v271
    %v602 = vpop.f32.mrf.mxu0
    %v603 = vadd.f32 %v590, %v602
    %v604 = vpop.f32.mrf.mxu0
    %605 = vdwg.mxu0
    %v638 = vunpack.c.l.b16 %v168
    %v639 = vunpack.c.h.b16 %v168
    %v640 = vunpack.c.l.b16 %v169
    %v641 = vunpack.c.l.b16 %v170
    %v642 = vunpack.c.h.b16 %v170
    %v643 = vunpack.c.l.b16 %v171
    %v644 = vunpack.c.l.b16 %v172
    %v645 = vunpack.c.h.b16 %v172
    %v646 = vunpack.c.l.b16 %v173
    %v647 = vunpack.c.l.b16 %v174
    %v648 = vunpack.c.h.b16 %v174
    %v649 = vunpack.c.l.b16 %v175
    %v650 = vunpack.c.l.b16 %v176
    %v651 = vunpack.c.h.b16 %v176
    %v652 = vunpack.c.l.b16 %v177
    %v653 = vunpack.c.l.b16 %v178
    %v654 = vunpack.c.h.b16 %v178
    %v655 = vunpack.c.l.b16 %v179
    %v656 = vunpack.c.l.b16 %v180
    %v657 = vunpack.c.h.b16 %v180
    %v658 = vunpack.c.l.b16 %v181
    %v659 = vunpack.c.l.b16 %v182
    %v660 = vunpack.c.h.b16 %v182
    %v661 = vunpack.c.l.b16 %v183
    %v662 = vunpack.c.l.b16 %v184
    %v663 = vunpack.c.h.b16 %v184
    %v664 = vunpack.c.l.b16 %v185
    %v665 = vunpack.c.l.b16 %v186
    %v666 = vunpack.c.h.b16 %v186
    %v667 = vunpack.c.l.b16 %v187
    %v668 = vunpack.c.l.b16 %v188
    %v669 = vunpack.c.h.b16 %v188
    %v670 = vunpack.c.l.b16 %v189
    %v671 = vunpack.c.l.b16 %v190
    %v672 = vunpack.c.h.b16 %v190
    %v673 = vunpack.c.l.b16 %v191
    %v674 = vunpack.c.l.b16 %v192
    %v675 = vunpack.c.h.b16 %v192
    %v676 = vunpack.c.l.b16 %v193
    %v677 = vunpack.c.l.b16 %v194
    %v678 = vunpack.c.h.b16 %v194
    %v679 = vunpack.c.l.b16 %v195
    %v680 = vunpack.c.l.b16 %v196
    %v681 = vunpack.c.h.b16 %v196
    %v682 = vunpack.c.l.b16 %v197
    %v683 = vunpack.c.l.b16 %v198
    %v684 = vunpack.c.h.b16 %v198
    %v685 = vunpack.c.l.b16 %v199
    %v686 = vpack.c.b16 %v641, %v638
    %v687 = vpack.c.b16 %v642, %v639
    %v688 = vpack.c.b16 %v643, %v640
    %v689 = vpack.c.b16 %v647, %v644
    %v690 = vpack.c.b16 %v648, %v645
    %v691 = vpack.c.b16 %v649, %v646
    %v692 = vpack.c.b16 %v653, %v650
    %v693 = vpack.c.b16 %v654, %v651
    %v694 = vpack.c.b16 %v655, %v652
    %v695 = vpack.c.b16 %v659, %v656
    %v696 = vpack.c.b16 %v660, %v657
    %v697 = vpack.c.b16 %v661, %v658
    %v698 = vpack.c.b16 %v665, %v662
    %v699 = vpack.c.b16 %v666, %v663
    %v700 = vpack.c.b16 %v667, %v664
    %v701 = vpack.c.b16 %v671, %v668
    %v702 = vpack.c.b16 %v672, %v669
    %v703 = vpack.c.b16 %v673, %v670
    %v704 = vpack.c.b16 %v677, %v674
    %v705 = vpack.c.b16 %v678, %v675
    %v706 = vpack.c.b16 %v679, %v676
    %v707 = vpack.c.b16 %v683, %v680
    %v708 = vpack.c.b16 %v684, %v681
    %v709 = vpack.c.b16 %v685, %v682
    %734 = vmatpush.bf16.msra.mxu0 %v707
    %735 = vmatpush.bf16.msra.mxu0 %v704
    %736 = vmatpush.bf16.msra.mxu0 %v701
    %737 = vmatpush.bf16.msra.mxu0 %v698
    %738 = vmatpush.bf16.msra.mxu0 %v695
    %739 = vmatpush.bf16.msra.mxu0 %v692
    %740 = vmatpush.bf16.msra.mxu0 %v689
    %741 = vmatpush.bf16.msra.mxu0 %v686
    %742 = vmatmul.bf16.gmra.mxu0 %v200
    %v743 = vpop.f32.mrf.mxu0
    %v744 = vadd.f32 %v551, %v743
    %v745 = vpop.f32.mrf.mxu0
    %746 = vdwg.mxu0
    %747 = vmatpush.bf16.msra.mxu0 %v708
    %748 = vmatpush.bf16.msra.mxu0 %v705
    %749 = vmatpush.bf16.msra.mxu0 %v702
    %750 = vmatpush.bf16.msra.mxu0 %v699
    %751 = vmatpush.bf16.msra.mxu0 %v696
    %752 = vmatpush.bf16.msra.mxu0 %v693
    %753 = vmatpush.bf16.msra.mxu0 %v690
    %754 = vmatpush.bf16.msra.mxu0 %v687
    %755 = vmatmul.bf16.gmra.mxu0 %v200
    %v756 = vpop.f32.mrf.mxu0
    %v757 = vadd.f32 %v577, %v756
    %v758 = vpop.f32.mrf.mxu0
    %759 = vdwg.mxu0
    %760 = vmatpush.bf16.msra.mxu0 %v709
    %761 = vmatpush.bf16.msra.mxu0 %v706
    %762 = vmatpush.bf16.msra.mxu0 %v703
    %763 = vmatpush.bf16.msra.mxu0 %v700
    %764 = vmatpush.bf16.msra.mxu0 %v697
    %765 = vmatpush.bf16.msra.mxu0 %v694
    %766 = vmatpush.bf16.msra.mxu0 %v691
    %767 = vmatpush.bf16.msra.mxu0 %v688
    %768 = vmatmul.bf16.gmra.mxu0 %v200
    %v769 = vpop.f32.mrf.mxu0
    %v770 = vadd.f32 %v603, %v769
    %v771 = vpop.f32.mrf.mxu0
    %772 = vdwg.mxu0
    %v773 = vxor.u32 %v744, 2147483648
    %v774 = vmul.f32 %v773, 1.442695
    %v775 = vpow.pop %v774
    %v776 = vadd.f32 %v775, 1.0
    %v777 = vrcp.pop %v776
    %v778 = vmul.f32 %v776, %v777
    %v779 = vsub.f32 1.0, %v778
    %v780 = vmul.f32 %v777, %v779
    %v781 = vadd.f32 %v777, %v780
    %vm782 = vweird.f32 %v776
    %vm783 = vweird.f32 %v777
    %vm784 = vmor %vm782, %vm783
    %v785 = vsel %vm784, %v777, %v781
    %v786 = vand.u32 2147483647, %v776
    %vm787 = vcmp.eq.f32.partialorder %v786, 8.507059e+37
    %v788 = vand.u32 %v776, 2147483648
    %v789 = vor.u32 1.1754944e-38, %v788
    %v790 = vsel %vm787, %v789, %v785
    %v791 = vmul.f32 1.0, %v790
    %v792 = vxor.u32 %v757, 2147483648
    %v793 = vmul.f32 %v792, 1.442695
    %v794 = vpow.pop %v793
    %v795 = vadd.f32 %v794, 1.0
    %v796 = vrcp.pop %v795
    %v797 = vmul.f32 %v795, %v796
    %v798 = vsub.f32 1.0, %v797
    %v799 = vmul.f32 %v796, %v798
    %v800 = vadd.f32 %v796, %v799
    %vm801 = vweird.f32 %v795
    %vm802 = vweird.f32 %v796
    %vm803 = vmor %vm801, %vm802
    %v804 = vsel %vm803, %v796, %v800
    %v805 = vand.u32 2147483647, %v795
    %vm806 = vcmp.eq.f32.partialorder %v805, 8.507059e+37
    %v807 = vand.u32 %v795, 2147483648
    %v808 = vor.u32 1.1754944e-38, %v807
    %v809 = vsel %vm806, %v808, %v804
    %v810 = vmul.f32 1.0, %v809
    %v811 = vmul.f32 %v810, %v115
    %v812 = vadd.f32 %v770, %v811
    %v813 = vtanh.pop %v812
    %v814 = vsub.f32 1.0, %v791
    %v815 = vmul.f32 %v814, %v115
    %v816 = vmul.f32 %v791, %v813
    %v817 = vadd.f32 %v815, %v816
    %v818 = vld [vmem:[#allocation11] sm:$0xff]
    %v819 = vld [vmem:[#allocation11 + $0x8] sm:$0xff]
    %v820 = vld [vmem:[#allocation11 + $0x10] sm:$0xff]
    %v821 = vld [vmem:[#allocation11 + $0x18] sm:$0xff]
    %v822 = vld [vmem:[#allocation11 + $0x20] sm:$0xff]
    %v823 = vld [vmem:[#allocation11 + $0x28] sm:$0xff]
    %v824 = vld [vmem:[#allocation11 + $0x30] sm:$0xff]
    %v825 = vld [vmem:[#allocation11 + $0x38] sm:$0xff]
    %v826 = vld [vmem:[#allocation11 + $0x40] sm:$0xff]
    %v827 = vld [vmem:[#allocation11 + $0x48] sm:$0xff]
    %v828 = vld [vmem:[#allocation11 + $0x50] sm:$0xff]
    %v829 = vld [vmem:[#allocation11 + $0x58] sm:$0xff]
    %v830 = vld [vmem:[#allocation11 + $0x60] sm:$0xff]
    %v831 = vld [vmem:[#allocation11 + $0x68] sm:$0xff]
    %v832 = vld [vmem:[#allocation11 + $0x70] sm:$0xff]
    %v833 = vld [vmem:[#allocation11 + $0x78] sm:$0xff]
    %v834 = vpack.c.bf16 %v817, %v817
    %v851 = vunpack.c.l.b16 %v818
    %v852 = vunpack.c.h.b16 %v818
    %v853 = vunpack.c.l.b16 %v819
    %v854 = vunpack.c.h.b16 %v819
    %v855 = vunpack.c.l.b16 %v820
    %v856 = vunpack.c.h.b16 %v820
    %v857 = vunpack.c.l.b16 %v821
    %v858 = vunpack.c.h.b16 %v821
    %v859 = vunpack.c.l.b16 %v822
    %v860 = vunpack.c.h.b16 %v822
    %v861 = vunpack.c.l.b16 %v823
    %v862 = vunpack.c.h.b16 %v823
    %v863 = vunpack.c.l.b16 %v824
    %v864 = vunpack.c.h.b16 %v824
    %v865 = vunpack.c.l.b16 %v825
    %v866 = vunpack.c.h.b16 %v825
    %v867 = vunpack.c.l.b16 %v826
    %v868 = vunpack.c.h.b16 %v826
    %v869 = vunpack.c.l.b16 %v827
    %v870 = vunpack.c.h.b16 %v827
    %v871 = vunpack.c.l.b16 %v828
    %v872 = vunpack.c.h.b16 %v828
    %v873 = vunpack.c.l.b16 %v829
    %v874 = vunpack.c.h.b16 %v829
    %v875 = vunpack.c.l.b16 %v830
    %v876 = vunpack.c.h.b16 %v830
    %v877 = vunpack.c.l.b16 %v831
    %v878 = vunpack.c.h.b16 %v831
    %v879 = vunpack.c.l.b16 %v832
    %v880 = vunpack.c.h.b16 %v832
    %v881 = vunpack.c.l.b16 %v833
    %v882 = vunpack.c.h.b16 %v833
    %v883 = vpack.c.b16 %v853, %v851
    %v884 = vpack.c.b16 %v854, %v852
    %v885 = vpack.c.b16 %v857, %v855
    %v886 = vpack.c.b16 %v858, %v856
    %v887 = vpack.c.b16 %v861, %v859
    %v888 = vpack.c.b16 %v862, %v860
    %v889 = vpack.c.b16 %v865, %v863
    %v890 = vpack.c.b16 %v866, %v864
    %v891 = vpack.c.b16 %v869, %v867
    %v892 = vpack.c.b16 %v870, %v868
    %v893 = vpack.c.b16 %v873, %v871
    %v894 = vpack.c.b16 %v874, %v872
    %v895 = vpack.c.b16 %v877, %v875
    %v896 = vpack.c.b16 %v878, %v876
    %v897 = vpack.c.b16 %v881, %v879
    %v898 = vpack.c.b16 %v882, %v880
    %915 = vmatpush.bf16.msra.mxu0 %v897
    %916 = vmatpush.bf16.msra.mxu0 %v895
    %917 = vmatpush.bf16.msra.mxu0 %v893
    %918 = vmatpush.bf16.msra.mxu0 %v891
    %919 = vmatpush.bf16.msra.mxu0 %v889
    %920 = vmatpush.bf16.msra.mxu0 %v887
    %921 = vmatpush.bf16.msra.mxu0 %v885
    %922 = vmatpush.bf16.msra.mxu0 %v883
    %923 = vmatmul.bf16.gmra.mxu0 %v834
    %v924 = vpop.f32.mrf.mxu0
    %v925 = vadd.f32 0.0, %v924
    %v926 = vpop.f32.mrf.mxu0
    %927 = vdwg.mxu0
    %928 = vmatpush.bf16.msra.mxu0 %v898
    %929 = vmatpush.bf16.msra.mxu0 %v896
    %930 = vmatpush.bf16.msra.mxu0 %v894
    %931 = vmatpush.bf16.msra.mxu0 %v892
    %932 = vmatpush.bf16.msra.mxu0 %v890
    %933 = vmatpush.bf16.msra.mxu0 %v888
    %934 = vmatpush.bf16.msra.mxu0 %v886
    %935 = vmatpush.bf16.msra.mxu0 %v884
    %936 = vmatmul.bf16.gmra.mxu0 %v834
    %v937 = vpop.f32.mrf.mxu0
    %v938 = vadd.f32 0.0, %v937
    %v939 = vpop.f32.mrf.mxu0
    %940 = vdwg.mxu0
    %v941 = vxor.u32 %v925, 2147483648
    %v942 = vmul.f32 %v941, 1.442695
    %v943 = vpow.pop %v942
    %v944 = vadd.f32 %v943, 1.0
    %v945 = vrcp.pop %v944
    %v946 = vmul.f32 %v944, %v945
    %v947 = vsub.f32 1.0, %v946
    %v948 = vmul.f32 %v945, %v947
    %v949 = vadd.f32 %v945, %v948
    %vm950 = vweird.f32 %v944
    %vm951 = vweird.f32 %v945
    %vm952 = vmor %vm950, %vm951
    %v953 = vsel %vm952, %v945, %v949
    %v954 = vand.u32 2147483647, %v944
    %vm955 = vcmp.eq.f32.partialorder %v954, 8.507059e+37
    %v956 = vand.u32 %v944, 2147483648
    %v957 = vor.u32 1.1754944e-38, %v956
    %v958 = vsel %vm955, %v957, %v953
    %v959 = vmul.f32 1.0, %v958
    %v960 = vtanh.pop %v938
    %v961 = vsub.f32 1.0, %v959
    %v962 = vmul.f32 %v961, %v960
    %v963 = vlaneseq
    %vm964 = vcmp.ge.s32.totalorder %v963, 0
    %vm965 = vcmp.lt.s32.totalorder %v963, 128
    %vm966 = vmand %vm964, %vm965
    %967 = vst.msk [vmem:[#allocation13] sm:$0x1] %vm966, %v817
    %968 = vst.msk [vmem:[#allocation13 + $0x1] sm:$0x1] %vm966, %v962
    // Predicated region
    $region50: #{tpu_custom_call.1} parent=1 // pred_check
      _
    $region51: #{tpu_custom_call.1} parent=1 // pred_check_branch
      %970 = sbr.rel (0) target = $region53
    $region52: #{tpu_custom_call.1} parent=1 // pred_region
      %972 = vsyncadd [#allocation4], 0
      %s974 = sshll.u32 [#allocation13], 4
      %s975 = int_to_ptr.vmem [resolvable:$true] %s974
      %s976 = sshll.u32 %s6, 4
      %s977 = int_to_ptr.hbm [resolvable:$true] %s976
      %979 = dma.vmem_to_hbm [thread:$0]  %s975, 32, %s977, [#allocation4]
    $region53: #{tpu_custom_call.1} parent=1 // pred_fallthru
      _
    // Predicated region
    $region54: #{tpu_custom_call.1} parent=1 // pred_check
      _
    $region55: #{tpu_custom_call.1} parent=1 // pred_check_branch
      %981 = sbr.rel (0) target = $region57
    $region56: #{tpu_custom_call.1} parent=1 // pred_region
      %983 = dma.done [#allocation4], 32
    $region57: #{tpu_custom_call.1} parent=1 // pred_fallthru
      _
    %984 = vsyncpa [#allocation3], 1
    %985 = vsyncpa [#allocation6], 1
    %986 = vsyncpa [#allocation9], 1
    %987 = vsyncpa [#allocation12], 1
    %988 = vsyncpa [#allocation4], 1

</llo_original>
